<compile_context>
chip_gen: v7x
topology: tpu7x:2x2x1
jax: 0.10.0
libtpu: 0.0.40
codegen_flags: <defaults>
</compile_context>

<pallas_src>
import jax
import jax.numpy as jnp
from jax.experimental import pallas as pl
from jax.experimental.pallas import tpu as pltpu


# ------------------------------ fused kernel --------------------------------

def _full_net_kernel(ns_ref, s_ref,
                     ns_w_ref, ns_b_ref,
                     s_w_ref, s_b_ref,
                     w1_ref, b1_ref,
                     w2_ref, b2_ref,
                     o_ref):
    f32 = jnp.float32

    # ns_net embedding layer: relu(ns @ Wns + bns)
    ns_emb = jnp.maximum(
        jnp.dot(ns_ref[...], ns_w_ref[...], preferred_element_type=f32)
        + ns_b_ref[...], 0.0)

    # s_net embedding layer: relu(s @ Ws + bs)
    s_emb = jnp.maximum(
        jnp.dot(s_ref[...], s_w_ref[...], preferred_element_type=f32)
        + s_b_ref[...], 0.0)

    # blend layer 1 with the concat folded in:
    #   relu(concat(ns_emb, s_emb) @ W1 + b1)
    #     == relu(ns_emb @ W1[:H] + s_emb @ W1[H:] + b1)
    # H is a multiple of 8 so the in-kernel row slices are sublane-aligned.
    H = ns_w_ref.shape[1]
    h = (jnp.dot(ns_emb, w1_ref[:H, :], preferred_element_type=f32)
         + jnp.dot(s_emb, w1_ref[H:, :], preferred_element_type=f32)
         + b1_ref[...])
    h = jnp.maximum(h, 0.0)

    # blend layer 2 (class dim zero-padded to lane width by the wrapper).
    o_ref[...] = (jnp.dot(h, w2_ref[...], preferred_element_type=f32)
                  + b2_ref[...]).astype(o_ref.dtype)


# -------------------------------- wrapper ------------------------------------

def full_net_forward(ns_features, s_features, params, *, block_b=256):
    """Fused Pallas implementation of Full_Net.forward."""
    B, NS_DIM = ns_features.shape
    _, S_DIM = s_features.shape
    H = params["ns_w"].shape[1]
    C = params["bl_w2"].shape[1]

    # ---- lane-dense output: pad the class dim to a multiple of 128 ----------
    Cp = max(128, ((C + 127) // 128) * 128)
    w2p = jnp.pad(params["bl_w2"], ((0, 0), (0, Cp - C)))
    b2p = jnp.pad(params["bl_b2"], ((0, 0), (0, Cp - C)))

    # ---- batch tiling: one block for small B, 8-aligned tiles otherwise -----
    if B <= block_b:
        tm, Bp = B, B
    else:
        tm = block_b                      # multiple of 8 (and of 128)
        Bp = ((B + tm - 1) // tm) * tm
    if Bp != B:
        pad = ((0, Bp - B), (0, 0))
        ns_features = jnp.pad(ns_features, pad)
        s_features = jnp.pad(s_features, pad)
    grid = (Bp // tm,)

    # Weights use a constant index_map so they are DMA'd once and stay
    # VMEM-resident across batch-grid steps; activations stream per step.
    const = lambda i: (0, 0)
    batch = lambda i: (i, 0)

    out = pl.pallas_call(
        _full_net_kernel,
        out_shape=jax.ShapeDtypeStruct((Bp, Cp), jnp.float32),
        grid=grid,
        in_specs=[
            pl.BlockSpec((tm, NS_DIM), batch),      # ns_features
            pl.BlockSpec((tm, S_DIM), batch),       # s_features
            pl.BlockSpec((NS_DIM, H), const),       # ns_w
            pl.BlockSpec((1, H), const),            # ns_b
            pl.BlockSpec((S_DIM, H), const),        # s_w
            pl.BlockSpec((1, H), const),            # s_b
            pl.BlockSpec((2 * H, H), const),        # bl_w1 (whole; split in-kernel)
            pl.BlockSpec((1, H), const),            # bl_b1
            pl.BlockSpec((H, Cp), const),           # bl_w2 (lane-padded)
            pl.BlockSpec((1, Cp), const),           # bl_b2 (lane-padded)
        ],
        out_specs=pl.BlockSpec((tm, Cp), batch),
        compiler_params=pltpu.CompilerParams(
            dimension_semantics=("parallel",)),
    )(ns_features, s_features,
      params["ns_w"], params["ns_b"],
      params["s_w"], params["s_b"],
      params["bl_w1"], params["bl_b1"],
      w2p, b2p)

    return out[:B, :C]


# -------------------------- parameter construction ---------------------------

def init_params(key, ns_dim, s_dim, hid, num_classes):
    def uinit(k, shape, fan_in):
        lim = 1.0 / jnp.sqrt(jnp.float32(fan_in))
        return jax.random.uniform(k, shape, jnp.float32, -lim, lim)

    ks = jax.random.split(key, 6)
    return {
        "ns_w": uinit(ks[0], (ns_dim, hid), ns_dim),
        "ns_b": uinit(ks[1], (1, hid), ns_dim),
        "s_w": uinit(ks[2], (s_dim, hid), s_dim),
        "s_b": uinit(ks[3], (1, hid), s_dim),
        "bl_w1": uinit(ks[4], (2 * hid, hid), 2 * hid),
        "bl_b1": jnp.zeros((1, hid), jnp.float32),
        "bl_w2": uinit(ks[5], (hid, num_classes), hid),
        "bl_b2": jnp.zeros((1, num_classes), jnp.float32),
    }


# --------------------------- pure-JAX reference -------------------------------

def full_net_ref(ns_features, s_features, p):
    ns_emb = jnp.maximum(ns_features @ p["ns_w"] + p["ns_b"], 0.0)
    s_emb = jnp.maximum(s_features @ p["s_w"] + p["s_b"], 0.0)
    blended = jnp.concatenate([ns_emb, s_emb], axis=1)   # torch.cat(dim=1)
    h = jnp.maximum(blended @ p["bl_w1"] + p["bl_b1"], 0.0)
    return h @ p["bl_w2"] + p["bl_b2"]


# ---------------------------------- main --------------------------------------

if __name__ == "__main__":
    BATCH = 2
    NS_DIM = 16
    S_DIM = 32
    HID = 32
    NUM_CLASSES = 4

    key = jax.random.PRNGKey(0)
    k_ns, k_s, k_p = jax.random.split(key, 3)

    ns_features = jax.random.normal(k_ns, (BATCH, NS_DIM), jnp.float32)
    s_features = jax.random.normal(k_s, (BATCH, S_DIM), jnp.float32)
    params = init_params(k_p, NS_DIM, S_DIM, HID, NUM_CLASSES)

    out = full_net_forward(ns_features, s_features, params)
    out = jax.block_until_ready(out)

    ref = full_net_ref(ns_features, s_features, params)
    assert out.shape == (BATCH, NUM_CLASSES), out.shape
    assert jnp.allclose(out, ref, atol=1e-5, rtol=1e-5), "mismatch vs reference"

    print("KERNEL_OK")
</pallas_src>

<mosaic_0001>
module attributes {stable_mosaic.version = 11 : i64} {
  func.func @_full_net_kernel(%arg0: i32, %arg1: memref<2x16xf32, #tpu.memory_space<vmem>>, %arg2: memref<2x32xf32, #tpu.memory_space<vmem>>, %arg3: memref<16x32xf32, #tpu.memory_space<vmem>>, %arg4: memref<1x32xf32, #tpu.memory_space<vmem>>, %arg5: memref<32x32xf32, #tpu.memory_space<vmem>>, %arg6: memref<1x32xf32, #tpu.memory_space<vmem>>, %arg7: memref<64x32xf32, #tpu.memory_space<vmem>>, %arg8: memref<1x32xf32, #tpu.memory_space<vmem>>, %arg9: memref<32x128xf32, #tpu.memory_space<vmem>>, %arg10: memref<1x128xf32, #tpu.memory_space<vmem>>, %arg11: memref<2x128xf32, #tpu.memory_space<vmem>>) attributes {dimension_semantics = [#tpu.dimension_semantics<parallel>], iteration_bounds = array<i64: 1>, scalar_prefetch = 0 : i64, scratch_operands = 0 : i64, tpu.core_type = #tpu.core_type<tc>, window_params = [{transform_indices = @transform_0, window_bounds = array<i64: 2, 16>}, {transform_indices = @transform_1, window_bounds = array<i64: 2, 32>}, {pipeline_mode = #tpu.pipeline_mode<synchronous>, transform_indices = @transform_2, window_bounds = array<i64: 16, 32>}, {pipeline_mode = #tpu.pipeline_mode<synchronous>, transform_indices = @transform_3, window_bounds = array<i64: 1, 32>}, {pipeline_mode = #tpu.pipeline_mode<synchronous>, transform_indices = @transform_4, window_bounds = array<i64: 32, 32>}, {pipeline_mode = #tpu.pipeline_mode<synchronous>, transform_indices = @transform_5, window_bounds = array<i64: 1, 32>}, {pipeline_mode = #tpu.pipeline_mode<synchronous>, transform_indices = @transform_6, window_bounds = array<i64: 64, 32>}, {pipeline_mode = #tpu.pipeline_mode<synchronous>, transform_indices = @transform_7, window_bounds = array<i64: 1, 32>}, {pipeline_mode = #tpu.pipeline_mode<synchronous>, transform_indices = @transform_8, window_bounds = array<i64: 32, 128>}, {pipeline_mode = #tpu.pipeline_mode<synchronous>, transform_indices = @transform_9, window_bounds = array<i64: 1, 128>}, {transform_indices = @transform_10, window_bounds = array<i64: 2, 128>}]} {
    %c0 = arith.constant 0 : index
    %c0_0 = arith.constant 0 : index
    %0 = vector.load %arg1[%c0, %c0_0] : memref<2x16xf32, #tpu.memory_space<vmem>>, vector<2x16xf32>
    %c0_1 = arith.constant 0 : index
    %c0_2 = arith.constant 0 : index
    %1 = vector.load %arg3[%c0_1, %c0_2] : memref<16x32xf32, #tpu.memory_space<vmem>>, vector<16x32xf32>
    %cst = arith.constant dense<0.000000e+00> : vector<2x32xf32>
    %2 = tpu.matmul %0, %1, %cst {dimension_numbers = #tpu.dot_dimension_numbers<[1], [0], [0], [1], [0, 0, 1, 1], [], []>} : vector<2x16xf32>, vector<16x32xf32>, vector<2x32xf32> -> vector<2x32xf32>
    %c0_3 = arith.constant 0 : index
    %c0_4 = arith.constant 0 : index
    %3 = vector.load %arg4[%c0_3, %c0_4] : memref<1x32xf32, #tpu.memory_space<vmem>>, vector<1x32xf32>
    %4 = vector.broadcast %3 : vector<1x32xf32> to vector<2x32xf32>
    %5 = arith.addf %2, %4 : vector<2x32xf32>
    %cst_5 = arith.constant 0.000000e+00 : f32
    %6 = vector.broadcast %cst_5 : f32 to vector<2x32xf32>
    %7 = arith.maximumf %5, %6 : vector<2x32xf32>
    %c0_6 = arith.constant 0 : index
    %c0_7 = arith.constant 0 : index
    %8 = vector.load %arg2[%c0_6, %c0_7] : memref<2x32xf32, #tpu.memory_space<vmem>>, vector<2x32xf32>
    %c0_8 = arith.constant 0 : index
    %c0_9 = arith.constant 0 : index
    %9 = vector.load %arg5[%c0_8, %c0_9] : memref<32x32xf32, #tpu.memory_space<vmem>>, vector<32x32xf32>
    %cst_10 = arith.constant dense<0.000000e+00> : vector<2x32xf32>
    %10 = tpu.matmul %8, %9, %cst_10 {dimension_numbers = #tpu.dot_dimension_numbers<[1], [0], [0], [1], [0, 0, 1, 1], [], []>} : vector<2x32xf32>, vector<32x32xf32>, vector<2x32xf32> -> vector<2x32xf32>
    %c0_11 = arith.constant 0 : index
    %c0_12 = arith.constant 0 : index
    %11 = vector.load %arg6[%c0_11, %c0_12] : memref<1x32xf32, #tpu.memory_space<vmem>>, vector<1x32xf32>
    %12 = vector.broadcast %11 : vector<1x32xf32> to vector<2x32xf32>
    %13 = arith.addf %10, %12 : vector<2x32xf32>
    %cst_13 = arith.constant 0.000000e+00 : f32
    %14 = vector.broadcast %cst_13 : f32 to vector<2x32xf32>
    %15 = arith.maximumf %13, %14 : vector<2x32xf32>
    %c0_14 = arith.constant 0 : index
    %c0_15 = arith.constant 0 : index
    %16 = vector.load %arg7[%c0_14, %c0_15] : memref<64x32xf32, #tpu.memory_space<vmem>>, vector<32x32xf32>
    %cst_16 = arith.constant dense<0.000000e+00> : vector<2x32xf32>
    %17 = tpu.matmul %7, %16, %cst_16 {dimension_numbers = #tpu.dot_dimension_numbers<[1], [0], [0], [1], [0, 0, 1, 1], [], []>} : vector<2x32xf32>, vector<32x32xf32>, vector<2x32xf32> -> vector<2x32xf32>
    %c32 = arith.constant 32 : index
    %c0_17 = arith.constant 0 : index
    %18 = vector.load %arg7[%c32, %c0_17] : memref<64x32xf32, #tpu.memory_space<vmem>>, vector<32x32xf32>
    %cst_18 = arith.constant dense<0.000000e+00> : vector<2x32xf32>
    %19 = tpu.matmul %15, %18, %cst_18 {dimension_numbers = #tpu.dot_dimension_numbers<[1], [0], [0], [1], [0, 0, 1, 1], [], []>} : vector<2x32xf32>, vector<32x32xf32>, vector<2x32xf32> -> vector<2x32xf32>
    %20 = arith.addf %17, %19 : vector<2x32xf32>
    %c0_19 = arith.constant 0 : index
    %c0_20 = arith.constant 0 : index
    %21 = vector.load %arg8[%c0_19, %c0_20] : memref<1x32xf32, #tpu.memory_space<vmem>>, vector<1x32xf32>
    %22 = vector.broadcast %21 : vector<1x32xf32> to vector<2x32xf32>
    %23 = arith.addf %20, %22 : vector<2x32xf32>
    %cst_21 = arith.constant 0.000000e+00 : f32
    %24 = vector.broadcast %cst_21 : f32 to vector<2x32xf32>
    %25 = arith.maximumf %23, %24 : vector<2x32xf32>
    %c0_22 = arith.constant 0 : index
    %c0_23 = arith.constant 0 : index
    %26 = vector.load %arg9[%c0_22, %c0_23] : memref<32x128xf32, #tpu.memory_space<vmem>>, vector<32x128xf32>
    %cst_24 = arith.constant dense<0.000000e+00> : vector<2x128xf32>
    %27 = tpu.matmul %25, %26, %cst_24 {dimension_numbers = #tpu.dot_dimension_numbers<[1], [0], [0], [1], [0, 0, 1, 1], [], []>} : vector<2x32xf32>, vector<32x128xf32>, vector<2x128xf32> -> vector<2x128xf32>
    %c0_25 = arith.constant 0 : index
    %c0_26 = arith.constant 0 : index
    %28 = vector.load %arg10[%c0_25, %c0_26] : memref<1x128xf32, #tpu.memory_space<vmem>>, vector<1x128xf32>
    %29 = vector.broadcast %28 : vector<1x128xf32> to vector<2x128xf32>
    %30 = arith.addf %27, %29 : vector<2x128xf32>
    %c0_27 = arith.constant 0 : index
    %c0_28 = arith.constant 0 : index
    %31 = vector.load %arg11[%c0_27, %c0_28] : memref<2x128xf32, #tpu.memory_space<vmem>>, vector<2x128xf32>
    tpu.vector_store %arg11[%c0_27, %c0_28], %30 {strides = array<i32>} : memref<2x128xf32, #tpu.memory_space<vmem>>, vector<2x128xf32>,
    return
  }
  func.func @transform_0(%arg0: i32) -> (i32, i32) {
    %c0_i32 = arith.constant 0 : i32
    %c0_i32_0 = arith.constant 0 : i32
    return %arg0, %c0_i32 : i32, i32
  }
  func.func @transform_1(%arg0: i32) -> (i32, i32) {
    %c0_i32 = arith.constant 0 : i32
    %c0_i32_0 = arith.constant 0 : i32
    return %arg0, %c0_i32 : i32, i32
  }
  func.func @transform_2(%arg0: i32) -> (i32, i32) {
    %c0_i32 = arith.constant 0 : i32
    %c0_i32_0 = arith.constant 0 : i32
    %c0_i32_1 = arith.constant 0 : i32
    return %c0_i32, %c0_i32_0 : i32, i32
  }
  func.func @transform_3(%arg0: i32) -> (i32, i32) {
    %c0_i32 = arith.constant 0 : i32
    %c0_i32_0 = arith.constant 0 : i32
    %c0_i32_1 = arith.constant 0 : i32
    return %c0_i32, %c0_i32_0 : i32, i32
  }
  func.func @transform_4(%arg0: i32) -> (i32, i32) {
    %c0_i32 = arith.constant 0 : i32
    %c0_i32_0 = arith.constant 0 : i32
    %c0_i32_1 = arith.constant 0 : i32
    return %c0_i32, %c0_i32_0 : i32, i32
  }
  func.func @transform_5(%arg0: i32) -> (i32, i32) {
    %c0_i32 = arith.constant 0 : i32
    %c0_i32_0 = arith.constant 0 : i32
    %c0_i32_1 = arith.constant 0 : i32
    return %c0_i32, %c0_i32_0 : i32, i32
  }
  func.func @transform_6(%arg0: i32) -> (i32, i32) {
    %c0_i32 = arith.constant 0 : i32
    %c0_i32_0 = arith.constant 0 : i32
    %c0_i32_1 = arith.constant 0 : i32
    return %c0_i32, %c0_i32_0 : i32, i32
  }
  func.func @transform_7(%arg0: i32) -> (i32, i32) {
    %c0_i32 = arith.constant 0 : i32
    %c0_i32_0 = arith.constant 0 : i32
    %c0_i32_1 = arith.constant 0 : i32
    return %c0_i32, %c0_i32_0 : i32, i32
  }
  func.func @transform_8(%arg0: i32) -> (i32, i32) {
    %c0_i32 = arith.constant 0 : i32
    %c0_i32_0 = arith.constant 0 : i32
    %c0_i32_1 = arith.constant 0 : i32
    return %c0_i32, %c0_i32_0 : i32, i32
  }
  func.func @transform_9(%arg0: i32) -> (i32, i32) {
    %c0_i32 = arith.constant 0 : i32
    %c0_i32_0 = arith.constant 0 : i32
    %c0_i32_1 = arith.constant 0 : i32
    return %c0_i32, %c0_i32_0 : i32, i32
  }
  func.func @transform_10(%arg0: i32) -> (i32, i32) {
    %c0_i32 = arith.constant 0 : i32
    %c0_i32_0 = arith.constant 0 : i32
    return %arg0, %c0_i32 : i32, i32
  }
}

</mosaic_0001>

<llo_original>
// kernel: tpu_custom_call.1
$region0: #{tpu_custom_call.1}
  #allocation0 [shape = 'u32[]', space=smem, size = 0x4, offset = 0x4, fixed_abs, tag = 'smem constant byte address 0x4 - core index']
  #allocation1 [shape = 'u32[144,128]{1,0:T(1,128)}', space=vmem, size = 0x12000, scoped, tag = 'internal scratch']
  %s0 = inlined_call_operand.vmem [shape: f32[2,16], index: 0, kind: input, shape index: {}]
  %s1 = inlined_call_operand.vmem [shape: f32[2,32], index: 1, kind: input, shape index: {}]
  %s2 = inlined_call_operand.vmem [shape: f32[16,32], index: 2, kind: input, shape index: {}]
  %s3 = inlined_call_operand.vmem [shape: f32[1,32], index: 3, kind: input, shape index: {}]
  %s4 = inlined_call_operand.vmem [shape: f32[32,32], index: 4, kind: input, shape index: {}]
  %s5 = inlined_call_operand.vmem [shape: f32[1,32], index: 5, kind: input, shape index: {}]
  %s6 = inlined_call_operand.vmem [shape: f32[64,32], index: 6, kind: input, shape index: {}]
  %s7 = inlined_call_operand.vmem [shape: f32[1,32], index: 7, kind: input, shape index: {}]
  %s8 = inlined_call_operand.vmem [shape: f32[32,128], index: 8, kind: input, shape index: {}]
  %s9 = inlined_call_operand.vmem [shape: f32[1,128], index: 9, kind: input, shape index: {}]
  %s10 = inlined_call_operand.hbm [shape: f32[2,128], index: 10, kind: output, shape index: {}]
  %s11 = sld [smem:[#allocation0]]
  $region50: #{tpu_custom_call.1} parent=0
    _
  %s13 = ssub.s32 1, %s11
  %s14 = scalar_select 0, %s13, %s11
  $region1: #{tpu_custom_call.1} parent=0
    #allocation2 [shape = 'u8[1024]{0}', space=vmem, size = 0x400, scoped, tag = 'output window, operand 0, single buffered']
    #allocation3 [shape = 's32[1]{0}', space=sflag, size = 0x4, scoped, tag = 'scoped memory for tpu_custom_call.1']
    %15 = vsyncpa [#allocation3], 0
    // Predicated region
    $region2: #{tpu_custom_call.1} parent=1 // pred_check
      _
    $region3: #{tpu_custom_call.1} parent=1 // pred_check_branch
      %17 = sbr.rel (0) target = $region5
    $region4: #{tpu_custom_call.1} parent=1 // pred_region
      _
    $region5: #{tpu_custom_call.1} parent=1 // pred_fallthru
      _
    // Predicated region
    $region6: #{tpu_custom_call.1} parent=1 // pred_check
      _
    $region7: #{tpu_custom_call.1} parent=1 // pred_check_branch
      %19 = sbr.rel (0) target = $region9
    $region8: #{tpu_custom_call.1} parent=1 // pred_region
      _
    $region9: #{tpu_custom_call.1} parent=1 // pred_fallthru
      _
    // Predicated region
    $region10: #{tpu_custom_call.1} parent=1 // pred_check
      _
    $region11: #{tpu_custom_call.1} parent=1 // pred_check_branch
      %21 = sbr.rel (0) target = $region13
    $region12: #{tpu_custom_call.1} parent=1 // pred_region
      _
    $region13: #{tpu_custom_call.1} parent=1 // pred_fallthru
      _
    // Predicated region
    $region14: #{tpu_custom_call.1} parent=1 // pred_check
      _
    $region15: #{tpu_custom_call.1} parent=1 // pred_check_branch
      %23 = sbr.rel (0) target = $region17
    $region16: #{tpu_custom_call.1} parent=1 // pred_region
      _
    $region17: #{tpu_custom_call.1} parent=1 // pred_fallthru
      _
    // Predicated region
    $region18: #{tpu_custom_call.1} parent=1 // pred_check
      _
    $region19: #{tpu_custom_call.1} parent=1 // pred_check_branch
      %25 = sbr.rel (0) target = $region21
    $region20: #{tpu_custom_call.1} parent=1 // pred_region
      _
    $region21: #{tpu_custom_call.1} parent=1 // pred_fallthru
      _
    // Predicated region
    $region22: #{tpu_custom_call.1} parent=1 // pred_check
      _
    $region23: #{tpu_custom_call.1} parent=1 // pred_check_branch
      %27 = sbr.rel (0) target = $region25
    $region24: #{tpu_custom_call.1} parent=1 // pred_region
      _
    $region25: #{tpu_custom_call.1} parent=1 // pred_fallthru
      _
    // Predicated region
    $region26: #{tpu_custom_call.1} parent=1 // pred_check
      _
    $region27: #{tpu_custom_call.1} parent=1 // pred_check_branch
      %29 = sbr.rel (0) target = $region29
    $region28: #{tpu_custom_call.1} parent=1 // pred_region
      _
    $region29: #{tpu_custom_call.1} parent=1 // pred_fallthru
      _
    // Predicated region
    $region30: #{tpu_custom_call.1} parent=1 // pred_check
      _
    $region31: #{tpu_custom_call.1} parent=1 // pred_check_branch
      %31 = sbr.rel (0) target = $region33
    $region32: #{tpu_custom_call.1} parent=1 // pred_region
      _
    $region33: #{tpu_custom_call.1} parent=1 // pred_fallthru
      _
    // Predicated region
    $region34: #{tpu_custom_call.1} parent=1 // pred_check
      _
    $region35: #{tpu_custom_call.1} parent=1 // pred_check_branch
      %33 = sbr.rel (0) target = $region37
    $region36: #{tpu_custom_call.1} parent=1 // pred_region
      _
    $region37: #{tpu_custom_call.1} parent=1 // pred_fallthru
      _
    // Predicated region
    $region38: #{tpu_custom_call.1} parent=1 // pred_check
      _
    $region39: #{tpu_custom_call.1} parent=1 // pred_check_branch
      %35 = sbr.rel (0) target = $region41
    $region40: #{tpu_custom_call.1} parent=1 // pred_region
      _
    $region41: #{tpu_custom_call.1} parent=1 // pred_fallthru
      _
    %v36 = vld [vmem:[%s0] sm:$0x3]
    %v37 = vld [vmem:[%s2] sm:$0xff]
    %v38 = vld [vmem:[%s2 + $0x8] sm:$0xff]
    %v39 = vld [vmem:[%s3] sm:$0x1]
    %v41 = vlaneseq
    %v42 = vshrl.u32 %v41, 7
    %v43 = vsub.s32 0, %v42
    %v44 = vrot.slane %v39, %v43
    %vm46 = vcmask 130048
    %v48 = vsel %vm46, %v36, 0
    %50 = vmatprep.subr.mxu0 0.0
    %51 = vmatpush1.msra.mxu0 %v37
    %52 = vmatprep.subr.mxu0 0.0
    %53 = vmatpush1.msra.mxu0 %v38
    %54 = vmatprep.subr.mxu0 0.0
    %55 = vmatpush1.msra.mxu0 0.0
    %56 = vmatprep.subr.mxu0 0.0
    %57 = vmatpush1.msra.mxu0 0.0
    %58 = vmatprep.subr.mxu0 0.0
    %59 = vmatpush1.msra.mxu0 0.0
    %60 = vmatprep.subr.mxu0 0.0
    %61 = vmatpush1.msra.mxu0 0.0
    %62 = vmatprep.subr.mxu0 0.0
    %63 = vmatpush1.msra.mxu0 0.0
    %64 = vmatprep.subr.mxu0 0.0
    %65 = vmatpush1.msra.mxu0 0.0
    %66 = vmatprep.subr.mxu0 0.0
    %67 = vmatpush1.msra.mxu0 0.0
    %68 = vmatprep.subr.mxu0 0.0
    %69 = vmatpush1.msra.mxu0 0.0
    %70 = vmatprep.subr.mxu0 0.0
    %71 = vmatpush1.msra.mxu0 0.0
    %72 = vmatprep.subr.mxu0 0.0
    %73 = vmatpush1.msra.mxu0 0.0
    %74 = vmatprep.subr.mxu0 0.0
    %75 = vmatpush1.msra.mxu0 0.0
    %76 = vmatprep.subr.mxu0 0.0
    %77 = vmatpush1.msra.mxu0 0.0
    %78 = vmatprep.subr.mxu0 0.0
    %79 = vmatpush1.msra.mxu0 0.0
    %80 = vmatprep.subr.mxu0 0.0
    %81 = vmatpush1.msra.mxu0 0.0
    %82 = vmatprep.subr.mxu0 0.0
    %83 = vmatpush1.msra.mxu0 0.0
    %84 = vmatprep.subr.mxu0 0.0
    %85 = vmatpush1.msra.mxu0 0.0
    %86 = vmatprep.subr.mxu0 0.0
    %87 = vmatpush1.msra.mxu0 0.0
    %88 = vmatprep.subr.mxu0 0.0
    %89 = vmatpush1.msra.mxu0 0.0
    %90 = vmatprep.subr.mxu0 0.0
    %91 = vmatpush1.msra.mxu0 0.0
    %92 = vmatprep.subr.mxu0 0.0
    %93 = vmatpush1.msra.mxu0 0.0
    %94 = vmatprep.subr.mxu0 0.0
    %95 = vmatpush1.msra.mxu0 0.0
    %96 = vmatprep.subr.mxu0 0.0
    %97 = vmatpush1.msra.mxu0 0.0
    %98 = vmatprep.subr.mxu0 0.0
    %99 = vmatpush1.msra.mxu0 0.0
    %100 = vmatprep.subr.mxu0 0.0
    %101 = vmatpush1.msra.mxu0 0.0
    %102 = vmatprep.subr.mxu0 0.0
    %103 = vmatpush1.msra.mxu0 0.0
    %104 = vmatprep.subr.mxu0 0.0
    %105 = vmatpush1.msra.mxu0 0.0
    %106 = vmatprep.subr.mxu0 0.0
    %107 = vmatpush1.msra.mxu0 0.0
    %108 = vmatprep.subr.mxu0 0.0
    %109 = vmatpush1.msra.mxu0 0.0
    %110 = vmatprep.subr.mxu0 0.0
    %111 = vmatpush1.msra.mxu0 0.0
    %112 = vmatprep.subr.mxu0 0.0
    %113 = vmatpush1.msra.mxu0 0.0
    %114 = vmatprep.mubr.f32.mxu0 0.0
    %115 = vmatmul.mubr.f32.gmra.mrb[0].mxu0 %v48
    %v116 = vpop.f32.mrb[0].mxu0
    %v117 = vadd.f32 %v44, %v116
    %v118 = vpop.f32.mrb[0].mxu0
    %119 = vdwg.mxu0
    %v120 = vmax.f32 %v117, 0.0
    %v121 = vld [vmem:[%s1] sm:$0x3]
    %v122 = vld [vmem:[%s4] sm:$0xff]
    %v123 = vld [vmem:[%s4 + $0x8] sm:$0xff]
    %v124 = vld [vmem:[%s4 + $0x10] sm:$0xff]
    %v125 = vld [vmem:[%s4 + $0x18] sm:$0xff]
    %v126 = vld [vmem:[%s5] sm:$0x1]
    %v128 = vlaneseq
    %v129 = vshrl.u32 %v128, 7
    %v130 = vsub.s32 0, %v129
    %v131 = vrot.slane %v126, %v130
    %vm133 = vcmask 261120
    %v135 = vsel %vm133, %v121, 0
    %137 = vmatprep.subr.mxu0 0.0
    %138 = vmatpush1.msra.mxu0 %v122
    %139 = vmatprep.subr.mxu0 0.0
    %140 = vmatpush1.msra.mxu0 %v123
    %141 = vmatprep.subr.mxu0 0.0
    %142 = vmatpush1.msra.mxu0 %v124
    %143 = vmatprep.subr.mxu0 0.0
    %144 = vmatpush1.msra.mxu0 %v125
    %145 = vmatprep.subr.mxu0 0.0
    %146 = vmatpush1.msra.mxu0 0.0
    %147 = vmatprep.subr.mxu0 0.0
    %148 = vmatpush1.msra.mxu0 0.0
    %149 = vmatprep.subr.mxu0 0.0
    %150 = vmatpush1.msra.mxu0 0.0
    %151 = vmatprep.subr.mxu0 0.0
    %152 = vmatpush1.msra.mxu0 0.0
    %153 = vmatprep.subr.mxu0 0.0
    %154 = vmatpush1.msra.mxu0 0.0
    %155 = vmatprep.subr.mxu0 0.0
    %156 = vmatpush1.msra.mxu0 0.0
    %157 = vmatprep.subr.mxu0 0.0
    %158 = vmatpush1.msra.mxu0 0.0
    %159 = vmatprep.subr.mxu0 0.0
    %160 = vmatpush1.msra.mxu0 0.0
    %161 = vmatprep.subr.mxu0 0.0
    %162 = vmatpush1.msra.mxu0 0.0
    %163 = vmatprep.subr.mxu0 0.0
    %164 = vmatpush1.msra.mxu0 0.0
    %165 = vmatprep.subr.mxu0 0.0
    %166 = vmatpush1.msra.mxu0 0.0
    %167 = vmatprep.subr.mxu0 0.0
    %168 = vmatpush1.msra.mxu0 0.0
    %169 = vmatprep.subr.mxu0 0.0
    %170 = vmatpush1.msra.mxu0 0.0
    %171 = vmatprep.subr.mxu0 0.0
    %172 = vmatpush1.msra.mxu0 0.0
    %173 = vmatprep.subr.mxu0 0.0
    %174 = vmatpush1.msra.mxu0 0.0
    %175 = vmatprep.subr.mxu0 0.0
    %176 = vmatpush1.msra.mxu0 0.0
    %177 = vmatprep.subr.mxu0 0.0
    %178 = vmatpush1.msra.mxu0 0.0
    %179 = vmatprep.subr.mxu0 0.0
    %180 = vmatpush1.msra.mxu0 0.0
    %181 = vmatprep.subr.mxu0 0.0
    %182 = vmatpush1.msra.mxu0 0.0
    %183 = vmatprep.subr.mxu0 0.0
    %184 = vmatpush1.msra.mxu0 0.0
    %185 = vmatprep.subr.mxu0 0.0
    %186 = vmatpush1.msra.mxu0 0.0
    %187 = vmatprep.subr.mxu0 0.0
    %188 = vmatpush1.msra.mxu0 0.0
    %189 = vmatprep.subr.mxu0 0.0
    %190 = vmatpush1.msra.mxu0 0.0
    %191 = vmatprep.subr.mxu0 0.0
    %192 = vmatpush1.msra.mxu0 0.0
    %193 = vmatprep.subr.mxu0 0.0
    %194 = vmatpush1.msra.mxu0 0.0
    %195 = vmatprep.subr.mxu0 0.0
    %196 = vmatpush1.msra.mxu0 0.0
    %197 = vmatprep.subr.mxu0 0.0
    %198 = vmatpush1.msra.mxu0 0.0
    %199 = vmatprep.subr.mxu0 0.0
    %200 = vmatpush1.msra.mxu0 0.0
    %201 = vmatprep.mubr.f32.mxu0 0.0
    %202 = vmatmul.mubr.f32.gmra.mrb[0].mxu0 %v135
    %v203 = vpop.f32.mrb[0].mxu0
    %v204 = vadd.f32 %v131, %v203
    %v205 = vpop.f32.mrb[0].mxu0
    %206 = vdwg.mxu0
    %v207 = vmax.f32 %v204, 0.0
    %v208 = vld [vmem:[%s6] sm:$0xff]
    %v209 = vld [vmem:[%s6 + $0x8] sm:$0xff]
    %v210 = vld [vmem:[%s6 + $0x10] sm:$0xff]
    %v211 = vld [vmem:[%s6 + $0x18] sm:$0xff]
    %v212 = vld [vmem:[%s6 + $0x20] sm:$0xff]
    %v213 = vld [vmem:[%s6 + $0x28] sm:$0xff]
    %v214 = vld [vmem:[%s6 + $0x30] sm:$0xff]
    %v215 = vld [vmem:[%s6 + $0x38] sm:$0xff]
    %v217 = vsel %vm133, %v207, 0
    %219 = vmatprep.subr.mxu0 0.0
    %220 = vmatpush1.msra.mxu0 %v212
    %221 = vmatprep.subr.mxu0 0.0
    %222 = vmatpush1.msra.mxu0 %v213
    %223 = vmatprep.subr.mxu0 0.0
    %224 = vmatpush1.msra.mxu0 %v214
    %225 = vmatprep.subr.mxu0 0.0
    %226 = vmatpush1.msra.mxu0 %v215
    %227 = vmatprep.subr.mxu0 0.0
    %228 = vmatpush1.msra.mxu0 0.0
    %229 = vmatprep.subr.mxu0 0.0
    %230 = vmatpush1.msra.mxu0 0.0
    %231 = vmatprep.subr.mxu0 0.0
    %232 = vmatpush1.msra.mxu0 0.0
    %233 = vmatprep.subr.mxu0 0.0
    %234 = vmatpush1.msra.mxu0 0.0
    %235 = vmatprep.subr.mxu0 0.0
    %236 = vmatpush1.msra.mxu0 0.0
    %237 = vmatprep.subr.mxu0 0.0
    %238 = vmatpush1.msra.mxu0 0.0
    %239 = vmatprep.subr.mxu0 0.0
    %240 = vmatpush1.msra.mxu0 0.0
    %241 = vmatprep.subr.mxu0 0.0
    %242 = vmatpush1.msra.mxu0 0.0
    %243 = vmatprep.subr.mxu0 0.0
    %244 = vmatpush1.msra.mxu0 0.0
    %245 = vmatprep.subr.mxu0 0.0
    %246 = vmatpush1.msra.mxu0 0.0
    %247 = vmatprep.subr.mxu0 0.0
    %248 = vmatpush1.msra.mxu0 0.0
    %249 = vmatprep.subr.mxu0 0.0
    %250 = vmatpush1.msra.mxu0 0.0
    %251 = vmatprep.subr.mxu0 0.0
    %252 = vmatpush1.msra.mxu0 0.0
    %253 = vmatprep.subr.mxu0 0.0
    %254 = vmatpush1.msra.mxu0 0.0
    %255 = vmatprep.subr.mxu0 0.0
    %256 = vmatpush1.msra.mxu0 0.0
    %257 = vmatprep.subr.mxu0 0.0
    %258 = vmatpush1.msra.mxu0 0.0
    %259 = vmatprep.subr.mxu0 0.0
    %260 = vmatpush1.msra.mxu0 0.0
    %261 = vmatprep.subr.mxu0 0.0
    %262 = vmatpush1.msra.mxu0 0.0
    %263 = vmatprep.subr.mxu0 0.0
    %264 = vmatpush1.msra.mxu0 0.0
    %265 = vmatprep.subr.mxu0 0.0
    %266 = vmatpush1.msra.mxu0 0.0
    %267 = vmatprep.subr.mxu0 0.0
    %268 = vmatpush1.msra.mxu0 0.0
    %269 = vmatprep.subr.mxu0 0.0
    %270 = vmatpush1.msra.mxu0 0.0
    %271 = vmatprep.subr.mxu0 0.0
    %272 = vmatpush1.msra.mxu0 0.0
    %273 = vmatprep.subr.mxu0 0.0
    %274 = vmatpush1.msra.mxu0 0.0
    %275 = vmatprep.subr.mxu0 0.0
    %276 = vmatpush1.msra.mxu0 0.0
    %277 = vmatprep.subr.mxu0 0.0
    %278 = vmatpush1.msra.mxu0 0.0
    %279 = vmatprep.subr.mxu0 0.0
    %280 = vmatpush1.msra.mxu0 0.0
    %281 = vmatprep.subr.mxu0 0.0
    %282 = vmatpush1.msra.mxu0 0.0
    %283 = vmatprep.mubr.f32.mxu0 0.0
    %284 = vmatmul.mubr.f32.gmra.mrb[0].mxu0 %v217
    %v285 = vpop.f32.mrb[0].mxu0
    %v286 = vadd.f32 0.0, %v285
    %v287 = vpop.f32.mrb[0].mxu0
    %288 = vdwg.mxu0
    %v290 = vsel %vm133, %v120, 0
    %292 = vmatprep.subr.mxu0 0.0
    %293 = vmatpush1.msra.mxu0 %v208
    %294 = vmatprep.subr.mxu0 0.0
    %295 = vmatpush1.msra.mxu0 %v209
    %296 = vmatprep.subr.mxu0 0.0
    %297 = vmatpush1.msra.mxu0 %v210
    %298 = vmatprep.subr.mxu0 0.0
    %299 = vmatpush1.msra.mxu0 %v211
    %300 = vmatprep.subr.mxu0 0.0
    %301 = vmatpush1.msra.mxu0 0.0
    %302 = vmatprep.subr.mxu0 0.0
    %303 = vmatpush1.msra.mxu0 0.0
    %304 = vmatprep.subr.mxu0 0.0
    %305 = vmatpush1.msra.mxu0 0.0
    %306 = vmatprep.subr.mxu0 0.0
    %307 = vmatpush1.msra.mxu0 0.0
    %308 = vmatprep.subr.mxu0 0.0
    %309 = vmatpush1.msra.mxu0 0.0
    %310 = vmatprep.subr.mxu0 0.0
    %311 = vmatpush1.msra.mxu0 0.0
    %312 = vmatprep.subr.mxu0 0.0
    %313 = vmatpush1.msra.mxu0 0.0
    %314 = vmatprep.subr.mxu0 0.0
    %315 = vmatpush1.msra.mxu0 0.0
    %316 = vmatprep.subr.mxu0 0.0
    %317 = vmatpush1.msra.mxu0 0.0
    %318 = vmatprep.subr.mxu0 0.0
    %319 = vmatpush1.msra.mxu0 0.0
    %320 = vmatprep.subr.mxu0 0.0
    %321 = vmatpush1.msra.mxu0 0.0
    %322 = vmatprep.subr.mxu0 0.0
    %323 = vmatpush1.msra.mxu0 0.0
    %324 = vmatprep.subr.mxu0 0.0
    %325 = vmatpush1.msra.mxu0 0.0
    %326 = vmatprep.subr.mxu0 0.0
    %327 = vmatpush1.msra.mxu0 0.0
    %328 = vmatprep.subr.mxu0 0.0
    %329 = vmatpush1.msra.mxu0 0.0
    %330 = vmatprep.subr.mxu0 0.0
    %331 = vmatpush1.msra.mxu0 0.0
    %332 = vmatprep.subr.mxu0 0.0
    %333 = vmatpush1.msra.mxu0 0.0
    %334 = vmatprep.subr.mxu0 0.0
    %335 = vmatpush1.msra.mxu0 0.0
    %336 = vmatprep.subr.mxu0 0.0
    %337 = vmatpush1.msra.mxu0 0.0
    %338 = vmatprep.subr.mxu0 0.0
    %339 = vmatpush1.msra.mxu0 0.0
    %340 = vmatprep.subr.mxu0 0.0
    %341 = vmatpush1.msra.mxu0 0.0
    %342 = vmatprep.subr.mxu0 0.0
    %343 = vmatpush1.msra.mxu0 0.0
    %344 = vmatprep.subr.mxu0 0.0
    %345 = vmatpush1.msra.mxu0 0.0
    %346 = vmatprep.subr.mxu0 0.0
    %347 = vmatpush1.msra.mxu0 0.0
    %348 = vmatprep.subr.mxu0 0.0
    %349 = vmatpush1.msra.mxu0 0.0
    %350 = vmatprep.subr.mxu0 0.0
    %351 = vmatpush1.msra.mxu0 0.0
    %352 = vmatprep.subr.mxu0 0.0
    %353 = vmatpush1.msra.mxu0 0.0
    %354 = vmatprep.subr.mxu0 0.0
    %355 = vmatpush1.msra.mxu0 0.0
    %356 = vmatprep.mubr.f32.mxu0 0.0
    %357 = vmatmul.mubr.f32.gmra.mrb[0].mxu0 %v290
    %v358 = vpop.f32.mrb[0].mxu0
    %v359 = vadd.f32 %v286, %v358
    %v360 = vpop.f32.mrb[0].mxu0
    %361 = vdwg.mxu0
    %v362 = vld [vmem:[%s7] sm:$0x1]
    %v364 = vlaneseq
    %v365 = vshrl.u32 %v364, 7
    %v366 = vsub.s32 0, %v365
    %v367 = vrot.slane %v362, %v366
    %v369 = vadd.f32 %v359, %v367
    %v370 = vmax.f32 %v369, 0.0
    %v371 = vld [vmem:[%s8] sm:$0xff]
    %v372 = vld [vmem:[%s8 + $0x8] sm:$0xff]
    %v373 = vld [vmem:[%s8 + $0x10] sm:$0xff]
    %v374 = vld [vmem:[%s8 + $0x18] sm:$0xff]
    %v375 = vld [vmem:[%s9] sm:$0x1]
    %v377 = vlaneseq
    %v378 = vshrl.u32 %v377, 7
    %v379 = vsub.s32 0, %v378
    %v380 = vrot.slane %v375, %v379
    %v383 = vsel %vm133, %v370, 0
    %385 = vmatprep.subr.mxu0 0.0
    %386 = vmatpush1.msra.mxu0 %v371
    %387 = vmatprep.subr.mxu0 0.0
    %388 = vmatpush1.msra.mxu0 %v372
    %389 = vmatprep.subr.mxu0 0.0
    %390 = vmatpush1.msra.mxu0 %v373
    %391 = vmatprep.subr.mxu0 0.0
    %392 = vmatpush1.msra.mxu0 %v374
    %393 = vmatprep.subr.mxu0 0.0
    %394 = vmatpush1.msra.mxu0 0.0
    %395 = vmatprep.subr.mxu0 0.0
    %396 = vmatpush1.msra.mxu0 0.0
    %397 = vmatprep.subr.mxu0 0.0
    %398 = vmatpush1.msra.mxu0 0.0
    %399 = vmatprep.subr.mxu0 0.0
    %400 = vmatpush1.msra.mxu0 0.0
    %401 = vmatprep.subr.mxu0 0.0
    %402 = vmatpush1.msra.mxu0 0.0
    %403 = vmatprep.subr.mxu0 0.0
    %404 = vmatpush1.msra.mxu0 0.0
    %405 = vmatprep.subr.mxu0 0.0
    %406 = vmatpush1.msra.mxu0 0.0
    %407 = vmatprep.subr.mxu0 0.0
    %408 = vmatpush1.msra.mxu0 0.0
    %409 = vmatprep.subr.mxu0 0.0
    %410 = vmatpush1.msra.mxu0 0.0
    %411 = vmatprep.subr.mxu0 0.0
    %412 = vmatpush1.msra.mxu0 0.0
    %413 = vmatprep.subr.mxu0 0.0
    %414 = vmatpush1.msra.mxu0 0.0
    %415 = vmatprep.subr.mxu0 0.0
    %416 = vmatpush1.msra.mxu0 0.0
    %417 = vmatprep.subr.mxu0 0.0
    %418 = vmatpush1.msra.mxu0 0.0
    %419 = vmatprep.subr.mxu0 0.0
    %420 = vmatpush1.msra.mxu0 0.0
    %421 = vmatprep.subr.mxu0 0.0
    %422 = vmatpush1.msra.mxu0 0.0
    %423 = vmatprep.subr.mxu0 0.0
    %424 = vmatpush1.msra.mxu0 0.0
    %425 = vmatprep.subr.mxu0 0.0
    %426 = vmatpush1.msra.mxu0 0.0
    %427 = vmatprep.subr.mxu0 0.0
    %428 = vmatpush1.msra.mxu0 0.0
    %429 = vmatprep.subr.mxu0 0.0
    %430 = vmatpush1.msra.mxu0 0.0
    %431 = vmatprep.subr.mxu0 0.0
    %432 = vmatpush1.msra.mxu0 0.0
    %433 = vmatprep.subr.mxu0 0.0
    %434 = vmatpush1.msra.mxu0 0.0
    %435 = vmatprep.subr.mxu0 0.0
    %436 = vmatpush1.msra.mxu0 0.0
    %437 = vmatprep.subr.mxu0 0.0
    %438 = vmatpush1.msra.mxu0 0.0
    %439 = vmatprep.subr.mxu0 0.0
    %440 = vmatpush1.msra.mxu0 0.0
    %441 = vmatprep.subr.mxu0 0.0
    %442 = vmatpush1.msra.mxu0 0.0
    %443 = vmatprep.subr.mxu0 0.0
    %444 = vmatpush1.msra.mxu0 0.0
    %445 = vmatprep.subr.mxu0 0.0
    %446 = vmatpush1.msra.mxu0 0.0
    %447 = vmatprep.subr.mxu0 0.0
    %448 = vmatpush1.msra.mxu0 0.0
    %449 = vmatprep.mubr.f32.mxu0 0.0
    %450 = vmatmul.mubr.f32.gmra.mrb[0].mxu0 %v383
    %v451 = vpop.f32.mrb[0].mxu0
    %v452 = vadd.f32 %v380, %v451
    %v453 = vpop.f32.mrb[0].mxu0
    %454 = vdwg.mxu0
    %455 = vst [vmem:[#allocation2] sm:$0x3] %v452
    // Predicated region
    $region42: #{tpu_custom_call.1} parent=1 // pred_check
      _
    $region43: #{tpu_custom_call.1} parent=1 // pred_check_branch
      %457 = sbr.rel (0) target = $region45
    $region44: #{tpu_custom_call.1} parent=1 // pred_region
      %s459 = ssub.s32 32, 32
      %460 = vsyncadd [#allocation3], %s459
      %s462 = sshll.u32 [#allocation2], 4
      %s463 = int_to_ptr.vmem [resolvable:$true] %s462
      %465 = dma.vmem_to_hbm [thread:$0]  %s463, 32, %s10, [#allocation3]
    $region45: #{tpu_custom_call.1} parent=1 // pred_fallthru
      _
    // Predicated region
    $region46: #{tpu_custom_call.1} parent=1 // pred_check
      _
    $region47: #{tpu_custom_call.1} parent=1 // pred_check_branch
      %467 = sbr.rel (0) target = $region49
    $region48: #{tpu_custom_call.1} parent=1 // pred_region
      %468 = dma.done [#allocation3], 32
    $region49: #{tpu_custom_call.1} parent=1 // pred_fallthru
      _
    %469 = vsyncpa [#allocation3], 1

</llo_original>
